<compile_context>
chip_gen: v7x
topology: tpu7x:2x2x1
jax: 0.10.0
libtpu: 0.0.40
codegen_flags: <defaults>
</compile_context>

<pallas_src>
import functools
import math

import numpy as np

import jax
import jax.numpy as jnp
from jax.experimental import pallas as pl
from jax.experimental.pallas import tpu as pltpu


def _alias_view_kernel(x_ref, o_ref):
    # The output HBM buffer is aliased to the input (input_output_aliases={0: 0}),
    # so the bytes are already in place.  pltpu.touch pins a fake read+write
    # dependency on the aliased output so the call is neither DCE'd nor
    # reordered; no data is moved.
    del x_ref
    pltpu.touch(o_ref)


def _dma_copy_kernel(x_ref, o_ref, sem):
    # Fallback: one HBM->HBM DMA at near-peak HBM bandwidth.  No VMEM staging,
    # no vld/vst slots, no vregs involved.
    cp = pltpu.make_async_copy(x_ref, o_ref, sem)
    cp.start()
    cp.wait()


@functools.lru_cache(maxsize=None)
def _alias_call(rows, cols, dtype):
    return pl.pallas_call(
        _alias_view_kernel,
        out_shape=jax.ShapeDtypeStruct((rows, cols), dtype),
        in_specs=[pl.BlockSpec(memory_space=pl.ANY)],
        out_specs=pl.BlockSpec(memory_space=pl.ANY),
        input_output_aliases={0: 0},
        compiler_params=pltpu.CompilerParams(has_side_effects=True),
        cost_estimate=pl.CostEstimate(flops=0, transcendentals=0,
                                      bytes_accessed=0),
    )


@functools.lru_cache(maxsize=None)
def _dma_call(rows, cols, dtype):
    nbytes = rows * cols * np.dtype(dtype).itemsize
    return pl.pallas_call(
        _dma_copy_kernel,
        out_shape=jax.ShapeDtypeStruct((rows, cols), dtype),
        in_specs=[pl.BlockSpec(memory_space=pl.ANY)],
        out_specs=pl.BlockSpec(memory_space=pl.ANY),
        scratch_shapes=[pltpu.SemaphoreType.DMA(())],
        cost_estimate=pl.CostEstimate(flops=0, transcendentals=0,
                                      bytes_accessed=2 * nbytes),
    )


_ALIAS_PATH_OK = None  # None = not yet attempted; True/False after first call.


def m_forward(x44, x30):
    """x44: python tuple (e.g. (1, 384)); x30: jnp array of shape (1, 384, 256)."""
    global _ALIAS_PATH_OK

    # operator.add on tuples -- pure Python glue (static shape arithmetic).
    x45 = tuple(x44) + (4, 64)
    assert math.prod(x30.shape) == math.prod(x45), "view size mismatch"

    # Collapse to a lane-dense 2D slab (free metadata reshape of contiguous
    # row-major data).  This also gives the pallas_call a fresh temporary whose
    # buffer can be safely donated/aliased to the output.
    rows = math.prod(x30.shape[:-1])
    cols = x30.shape[-1]
    x2d = jnp.reshape(x30, (rows, cols))

    out2d = None
    if _ALIAS_PATH_OK is not False:
        try:
            out2d = _alias_call(rows, cols, x30.dtype)(x2d)
            _ALIAS_PATH_OK = True
        except Exception:
            # If the zero-copy aliased path fails to lower on this jaxlib,
            # fall back (once) to the single HBM->HBM DMA copy.
            _ALIAS_PATH_OK = False
    if out2d is None:
        out2d = _dma_call(rows, cols, x30.dtype)(x2d)

    # The actual .view(x45): metadata-only reshape done in the wrapper for free
    # (a 64-wide last dim inside the kernel would force masked partial stores).
    return jnp.reshape(out2d, x45)


if __name__ == "__main__":
    key = jax.random.PRNGKey(0)
    # Shapes from the module spec: x30 is [1, 384, 256], x44 is the tuple (1, 384).
    x30 = jax.random.normal(key, (1, 384, 256), dtype=jnp.float32)
    x44 = (1, 384)

    # Reference (== torch .view for contiguous input), materialized before the
    # kernel call so it never depends on a buffer the kernel may donate.
    ref = jax.block_until_ready(jnp.reshape(x30, (1, 384, 4, 64)))

    out = m_forward(x44, x30)
    out = jax.block_until_ready(out)

    assert out.shape == (1, 384, 4, 64), out.shape
    assert out.dtype == x30.dtype
    assert bool(jnp.array_equal(out, ref))

    print("KERNEL_OK")
</pallas_src>

<mosaic_0001>
module attributes {stable_mosaic.version = 11 : i64} {
  func.func @_alias_view_kernel(%arg0: memref<384x256xf32, #tpu.memory_space<any>>, %arg1: memref<384x256xf32, #tpu.memory_space<any>>) attributes {dimension_semantics = [], scalar_prefetch = 0 : i64, scratch_operands = 0 : i64, tpu.core_type = #tpu.core_type<tc>} {
    return
  }
}

module attributes {stable_mosaic.version = 11 : i64} {
  func.func @_dma_copy_kernel(%arg0: memref<384x256xf32, #tpu.memory_space<any>>, %arg1: memref<384x256xf32, #tpu.memory_space<any>>, %arg2: memref<!tpu.dma_semaphore, #tpu.memory_space<semaphore_mem>>) attributes {dimension_semantics = [], scalar_prefetch = 0 : i64, scratch_operands = 1 : i64, tpu.core_type = #tpu.core_type<tc>} {
    tpu.enqueue_dma source(%arg0 : memref<384x256xf32, #tpu.memory_space<any>>) target(%arg1 : memref<384x256xf32, #tpu.memory_space<any>>) target_semaphore(%arg2 : memref<!tpu.dma_semaphore, #tpu.memory_space<semaphore_mem>>)
    tpu.wait_dma2 semaphore(%arg2 : memref<!tpu.dma_semaphore, #tpu.memory_space<semaphore_mem>>) src(%arg0 : memref<384x256xf32, #tpu.memory_space<any>>) dst(%arg1 : memref<384x256xf32, #tpu.memory_space<any>>)
    return
  }
}

</mosaic_0001>

<llo_original>
// kernel: tpu_custom_call.1
$region0: #{tpu_custom_call.1}
  #allocation0 [shape = 'u32[]', space=smem, size = 0x4, offset = 0x4, fixed_abs, tag = 'smem constant byte address 0x4 - core index']
  #allocation1 [shape = 'u32[144,128]{1,0:T(1,128)}', space=vmem, size = 0x12000, scoped, tag = 'internal scratch']
  %s0 = inlined_call_operand.hbm [shape: f32[384,256], index: 0, kind: input, shape index: {}, may-alias: {0,1}]
  %s1 = inlined_call_operand.hbm [shape: f32[384,256], index: 1, kind: output, shape index: {}, may-alias: {0,1}]
  %s2 = sld [smem:[#allocation0]]
  $region2: #{tpu_custom_call.1} parent=0
    _
  %s4 = ssub.s32 1, %s2
  %s5 = scalar_select 0, %s4, %s2

// kernel: tpu_custom_call.1
$region0: #{tpu_custom_call.1}
  #allocation0 [shape = 'u32[]', space=smem, size = 0x4, offset = 0x4, fixed_abs, tag = 'smem constant byte address 0x4 - core index']
  #allocation1 [shape = 'u32[144,128]{1,0:T(1,128)}', space=vmem, size = 0x12000, scoped, tag = 'internal scratch']
  #allocation2 [shape = 's32[1]{0}', space=sflag, size = 0x4, scoped, tag = 'scratch operand']
  #allocation3 [shape = 's32[]', space=sflag, size = 0x4, offset = 0, fixed_abs, tag = 'sflag constant byte address 0x0 - dummy sync flag']
  #allocation4 [shape = 'u32[0]{0}', space=smem, size = 0, offset = 0, fixed_abs, tag = 'smem constant byte address 0x0 - null']
  %s0 = inlined_call_operand.hbm [shape: f32[384,256], index: 0, kind: input, shape index: {}]
  %s1 = inlined_call_operand.hbm [shape: f32[384,256], index: 1, kind: output, shape index: {}]
  %s2 = sld [smem:[#allocation0]]
  $region2: #{tpu_custom_call.1} parent=0
    _
  %s4 = ssub.s32 1, %s2
  %s5 = scalar_select 0, %s4, %s2
  %s7 = sshll.u32 1, 14
  %s8 = sxor.u32 4294967295, %s7
  %s11 = sshll.u32 3, 24
  %s12 = sxor.u32 4294967295, %s11
  %s13 = sand.u32 0, %s12
  %s15 = sor.u32 %s13, 0
  %18 = dma.general %s0, 12288, %s1, [#allocation2], [#allocation3], [#allocation4], %s15, 0
  %s19 = smul.u32 8, 48
  %s20 = smul.u32 %s19, 2
  %s21 = sshll.u32 %s20, 4
  %22 = dma.done [#allocation2], %s21
  %23 = vsyncmov [#allocation2]
  %s24 = vpop.sfrf %23
  %p25 = scmp.eq.s32.totalorder %s24, 0
  %p26 = pneg %p25
  %28 = shalt.err (%p26)

</llo_original>
